<compile_context>
chip_gen: v6e
topology: v6e:2x2x1
jax: 0.10.0
libtpu: 0.0.40
codegen_flags: <defaults>
</compile_context>

<pallas_src>
import jax
import jax.numpy as jnp
import numpy as np
from jax.experimental import pallas as pl
from jax.experimental.pallas import tpu as pltpu

# stands in for cfg.model.coords_selection in {'start', 'end', 'center'}
COORDS_SELECTION = "center"


# ----------------------------- Pallas kernel -------------------------------
def _atom_distance_kernel(pos_ref, posT_ref, dist_ref, zmask_ref):
    # pos_ref block:  (TB, TI, 3)  -> row coordinates
    # posT_ref block: (TB, 3, TJ)  -> column coordinates (pre-transposed)
    pi = pos_ref[...]       # (TB, TI, 3)
    pjT = posT_ref[...]     # (TB, 3, TJ)

    # Pure VPU broadcast-subtract path (matches torch.cdist with
    # compute_mode='donot_use_mm_for_euclid_dist'; no MXU trick).
    # NOTE(perf review): verify with pl.lower_as_mlir that the (.,.,1)->(.,.,TJ)
    # lane broadcast of the row coords lands on the (idle) XLU, not the VALU.
    d0 = pi[:, :, 0:1] - pjT[:, 0:1, :]          # (TB, TI, TJ)
    d2 = d0 * d0                                  # init from first term
    d1 = pi[:, :, 1:2] - pjT[:, 1:2, :]
    d2 = d2 + d1 * d1
    dz = pi[:, :, 2:3] - pjT[:, 2:3, :]
    d2 = d2 + dz * dz

    # Mask from d^2 (0.001^2 == 1e-6): avoids the sqrt->compare dependency and
    # is written as int8 (minimal HBM writeback).
    zmask_ref[...] = (d2 <= 1e-6).astype(jnp.int8)

    # Single rsqrt replaces sqrt + exact reciprocal (top VALU win on v6e/v7x).
    dist_ref[...] = jax.lax.rsqrt(d2 + 1e-32)


# --------------------------- tiling heuristics ------------------------------
def _round_up(x, m):
    return ((x + m - 1) // m) * m


def _choose_tiles(B, N_pad):
    """Pick (TB, TI, TJ).

    Target ~1M output elements per grid step (~5 MB f32 dist + i8 mask,
    ~10 MB double-buffered plus a few MB of f32 intermediates) so per-step
    overhead is <10% of the writeback while staying under v7x's 32 MiB
    scoped-VMEM default.  TJ is always a multiple of 128 (lane-dense stores),
    TI a multiple of 128 (>= int8 sublane tiling).
    """
    ELEM_BUDGET = 1 << 20  # output elems per grid step

    TJ = min(N_pad, 2048)                                    # mult of 128
    TI = min(N_pad, max(128, (ELEM_BUDGET // TJ) // 128 * 128))
    TB = max(1, min(B, ELEM_BUDGET // (TI * TJ)))

    # v7x megacore: guarantee >= 2 grid steps along a parallel axis so the
    # second TensorCore is not idle (harmless on single-TC v5e/v6e).
    steps = pl.cdiv(B, TB) * pl.cdiv(N_pad, TI) * pl.cdiv(N_pad, TJ)
    if steps == 1:
        if B >= 2:
            TB = pl.cdiv(B, 2)
        elif N_pad >= 256:
            TI = _round_up(pl.cdiv(N_pad, 2), 128)
    return TB, TI, TJ


# ------------------------------ Pallas wrapper -------------------------------
def atom_pairwise_distances(pos_dense):
    """pos_dense: [B, N, 3] -> (dist [B,N_pad,N_pad] f32, zmask [B,N_pad,N_pad] i8, N_pad).

    Outputs stay padded (lane-dense) -- consumers must apply the node mask
    anyway; padded nodes sit at the origin so their distance comes back as
    1e16 with zmask != 0.
    """
    B, N, D = pos_dense.shape
    assert D == 3
    pos_dense = pos_dense.astype(jnp.float32)

    # Pad node dim to a lane-dense multiple of 128 so output stores are
    # unmasked full-width vst (no vst.msk partial stores for tiny graphs).
    N_pad = max(128, _round_up(N, 128))
    if N_pad != N:
        pos_dense = jnp.pad(pos_dense, ((0, 0), (0, N_pad - N), (0, 0)))

    TB, TI, TJ = _choose_tiles(B, N_pad)
    grid = (pl.cdiv(B, TB), pl.cdiv(N_pad, TI), pl.cdiv(N_pad, TJ))

    posT = jnp.transpose(pos_dense, (0, 2, 1))  # [B, 3, N_pad] (tiny)

    dist, zmask_i8 = pl.pallas_call(
        _atom_distance_kernel,
        out_shape=(
            jax.ShapeDtypeStruct((B, N_pad, N_pad), jnp.float32),
            jax.ShapeDtypeStruct((B, N_pad, N_pad), jnp.int8),
        ),
        grid_spec=pltpu.PrefetchScalarGridSpec(
            num_scalar_prefetch=0,
            grid=grid,
            in_specs=[
                pl.BlockSpec((TB, TI, 3), lambda b, i, j: (b, i, 0)),
                pl.BlockSpec((TB, 3, TJ), lambda b, i, j: (b, 0, j)),
            ],
            out_specs=[
                pl.BlockSpec((TB, TI, TJ), lambda b, i, j: (b, i, j)),
                pl.BlockSpec((TB, TI, TJ), lambda b, i, j: (b, i, j)),
            ],
        ),
        compiler_params=pltpu.CompilerParams(
            dimension_semantics=("parallel", "parallel", "parallel"),
        ),
    )(pos_dense, posT)

    return dist, zmask_i8, N_pad


# ------------------------------- JAX glue -----------------------------------
def coords_selection_fn(pos):
    if COORDS_SELECTION == "start":
        return pos[:, :3]
    elif COORDS_SELECTION == "end":
        return pos[:, -3:]
    elif COORDS_SELECTION == "center":
        return (pos[:, :3] + pos[:, -3:]) * 0.5
    raise NotImplementedError(f"Unknown coords_selection {COORDS_SELECTION}.")


def to_dense_batch(x, batch, num_graphs, max_nodes):
    # TODO(synk): data-dependent scatter (torch_geometric.to_dense_batch) kept
    # in plain JAX; the kernel consumes the already-dense [B, N, 3] tensor.
    n = x.shape[0]
    starts = jnp.searchsorted(batch, jnp.arange(num_graphs))
    idx = jnp.arange(n) - starts[batch]
    dense = jnp.zeros((num_graphs, max_nodes, x.shape[1]), x.dtype)
    dense = dense.at[batch, idx].set(x)
    mask = jnp.zeros((num_graphs, max_nodes), jnp.bool_).at[batch, idx].set(True)
    return dense, mask


def atom_distance_forward(pos, batch, num_graphs, max_nodes, unpad=True):
    """Mirrors AtomDistance.forward: returns distances, zero_distances_mask, mask.

    unpad=True  -> exact torch-module shapes/dtypes ([B,N_max,N_max] f32 / bool),
                   at the cost of one extra HBM pass each for the slice and the
                   bool cast.
    unpad=False -> production perf path: padded [B,N_pad,N_pad] outputs, int8
                   zero-mask (nonzero == True) and the node mask padded to
                   N_pad.  Padded nodes sit at the origin (distance 1e16,
                   zero-mask set); callers must apply `mask` exactly as with
                   the torch reference.
    """
    sel = coords_selection_fn(pos)
    dense_pos, mask = to_dense_batch(sel, batch, num_graphs, max_nodes)
    dist, zmask_i8, n_pad = atom_pairwise_distances(dense_pos)

    if unpad:
        n = max_nodes
        if n_pad != n:
            dist = dist[:, :n, :n]
            zmask_i8 = zmask_i8[:, :n, :n]
        return {
            "distances": dist,
            "zero_distances_mask": zmask_i8.astype(jnp.bool_),
            "mask": mask,
        }

    # TODO(synk): downstream consumers should accept the padded int8 mask (or
    # derive it as distances >= 1e3) to keep this zero-extra-HBM-pass path.
    if n_pad != max_nodes:
        mask = jnp.pad(mask, ((0, 0), (0, n_pad - max_nodes)))
    return {"distances": dist, "zero_distances_mask": zmask_i8, "mask": mask}


# --------------------------- numpy reference --------------------------------
def _numpy_reference(pos_np, nodes_per_graph, n_max):
    B = len(nodes_per_graph)
    sel_np = (pos_np[:, :3] + pos_np[:, -3:]) * 0.5
    dense_np = np.zeros((B, n_max, 3), np.float32)
    o = 0
    for g, n in enumerate(nodes_per_graph):
        dense_np[g, :n] = sel_np[o : o + n]
        o += n
    diff = dense_np[:, :, None, :] - dense_np[:, None, :, :]
    d_np = np.sqrt((diff ** 2).sum(-1))
    return 1.0 / (d_np + 1e-16), d_np <= 0.001


def _run_case(key, nodes_per_graph, F=6, unpad=True):
    B = len(nodes_per_graph)
    n_max = max(nodes_per_graph)
    num_nodes = sum(nodes_per_graph)

    pos = jax.random.normal(key, (num_nodes, F), dtype=jnp.float32)
    batch = jnp.concatenate(
        [jnp.full((n,), g, dtype=jnp.int32) for g, n in enumerate(nodes_per_graph)]
    )

    out = atom_distance_forward(pos, batch, B, n_max, unpad=unpad)
    jax.block_until_ready(out)

    ref_dist, ref_zmask = _numpy_reference(np.asarray(pos), nodes_per_graph, n_max)
    got_dist = np.asarray(out["distances"])[:, :n_max, :n_max]
    got_zmask = np.asarray(out["zero_distances_mask"])[:, :n_max, :n_max].astype(bool)

    assert np.allclose(got_dist, ref_dist, rtol=1e-5, atol=1e-5)
    assert np.array_equal(got_zmask, ref_zmask)
    assert out["distances"].dtype == jnp.float32
    if unpad:
        assert out["distances"].shape == (B, n_max, n_max)
        assert out["zero_distances_mask"].dtype == jnp.bool_
        assert out["mask"].shape == (B, n_max)


# --------------------------------- main --------------------------------------
if __name__ == "__main__":
    key = jax.random.PRNGKey(0)
    k0, k1, k2 = jax.random.split(key, 3)

    # Small case: 2 graphs with 7 and 9 nodes (N padded to 128); exact
    # torch-parity output path.
    _run_case(k0, [7, 9], unpad=True)

    # Larger case: N_max=130 -> N_pad=256; padded/perf output path (no
    # un-padding slice, int8 mask) verified against the valid region.
    _run_case(k1, [100, 130], unpad=False)

    # Single-graph case: B=1, N_max=260 -> N_pad=384; exercises the cdiv grid
    # with a masked partial row block (megacore split TI=256).
    _run_case(k2, [260], unpad=True)

    print("KERNEL_OK")
</pallas_src>

<mosaic_0001>
module attributes {stable_mosaic.version = 11 : i64} {
  func.func @_atom_distance_kernel(%arg0: i32, %arg1: i32, %arg2: i32, %arg3: memref<1x128x3xf32, #tpu.memory_space<vmem>>, %arg4: memref<1x3x128xf32, #tpu.memory_space<vmem>>, %arg5: memref<1x128x128xf32, #tpu.memory_space<vmem>>, %arg6: memref<1x128x128xi8, #tpu.memory_space<vmem>>) attributes {dimension_semantics = [#tpu.dimension_semantics<parallel>, #tpu.dimension_semantics<parallel>, #tpu.dimension_semantics<parallel>], iteration_bounds = array<i64: 2, 1, 1>, scalar_prefetch = 0 : i64, scratch_operands = 0 : i64, tpu.core_type = #tpu.core_type<tc>, window_params = [{transform_indices = @transform_0, window_bounds = array<i64: 1, 128, 3>}, {transform_indices = @transform_1, window_bounds = array<i64: 1, 3, 128>}, {transform_indices = @transform_2, window_bounds = array<i64: 1, 128, 128>}, {transform_indices = @transform_3, window_bounds = array<i64: 1, 128, 128>}]} {
    %c0 = arith.constant 0 : index
    %c0_0 = arith.constant 0 : index
    %c0_1 = arith.constant 0 : index
    %0 = vector.load %arg3[%c0, %c0_0, %c0_1] : memref<1x128x3xf32, #tpu.memory_space<vmem>>, vector<1x128x3xf32>
    %c0_2 = arith.constant 0 : index
    %c0_3 = arith.constant 0 : index
    %c0_4 = arith.constant 0 : index
    %1 = vector.load %arg4[%c0_2, %c0_3, %c0_4] : memref<1x3x128xf32, #tpu.memory_space<vmem>>, vector<1x3x128xf32>
    %2 = vector.extract_strided_slice %0 {offsets = [0, 0, 0], sizes = [1, 128, 1], strides = [1, 1, 1]} : vector<1x128x3xf32> to vector<1x128x1xf32>
    %3 = vector.extract_strided_slice %1 {offsets = [0, 0, 0], sizes = [1, 1, 128], strides = [1, 1, 1]} : vector<1x3x128xf32> to vector<1x1x128xf32>
    %4 = vector.broadcast %2 : vector<1x128x1xf32> to vector<1x128x128xf32>
    %5 = vector.broadcast %3 : vector<1x1x128xf32> to vector<1x128x128xf32>
    %6 = arith.subf %4, %5 : vector<1x128x128xf32>
    %7 = arith.mulf %6, %6 : vector<1x128x128xf32>
    %8 = vector.extract_strided_slice %0 {offsets = [0, 0, 1], sizes = [1, 128, 1], strides = [1, 1, 1]} : vector<1x128x3xf32> to vector<1x128x1xf32>
    %9 = vector.extract_strided_slice %1 {offsets = [0, 1, 0], sizes = [1, 1, 128], strides = [1, 1, 1]} : vector<1x3x128xf32> to vector<1x1x128xf32>
    %10 = vector.broadcast %8 : vector<1x128x1xf32> to vector<1x128x128xf32>
    %11 = vector.broadcast %9 : vector<1x1x128xf32> to vector<1x128x128xf32>
    %12 = arith.subf %10, %11 : vector<1x128x128xf32>
    %13 = arith.mulf %12, %12 : vector<1x128x128xf32>
    %14 = arith.addf %7, %13 : vector<1x128x128xf32>
    %15 = vector.extract_strided_slice %0 {offsets = [0, 0, 2], sizes = [1, 128, 1], strides = [1, 1, 1]} : vector<1x128x3xf32> to vector<1x128x1xf32>
    %16 = vector.extract_strided_slice %1 {offsets = [0, 2, 0], sizes = [1, 1, 128], strides = [1, 1, 1]} : vector<1x3x128xf32> to vector<1x1x128xf32>
    %17 = vector.broadcast %15 : vector<1x128x1xf32> to vector<1x128x128xf32>
    %18 = vector.broadcast %16 : vector<1x1x128xf32> to vector<1x128x128xf32>
    %19 = arith.subf %17, %18 : vector<1x128x128xf32>
    %20 = arith.mulf %19, %19 : vector<1x128x128xf32>
    %21 = arith.addf %14, %20 : vector<1x128x128xf32>
    %cst = arith.constant 9.99999997E-7 : f32
    %22 = vector.broadcast %cst : f32 to vector<1x128x128xf32>
    %23 = arith.cmpf ole, %21, %22 : vector<1x128x128xf32>
    %24 = arith.extui %23 : vector<1x128x128xi1> to vector<1x128x128xi8>
    %c0_5 = arith.constant 0 : index
    %c0_6 = arith.constant 0 : index
    %c0_7 = arith.constant 0 : index
    %25 = vector.load %arg6[%c0_5, %c0_6, %c0_7] : memref<1x128x128xi8, #tpu.memory_space<vmem>>, vector<1x128x128xi8>
    tpu.vector_store %arg6[%c0_5, %c0_6, %c0_7], %24 {strides = array<i32>} : memref<1x128x128xi8, #tpu.memory_space<vmem>>, vector<1x128x128xi8>,
    %cst_8 = arith.constant 1.000000e-32 : f32
    %26 = vector.broadcast %cst_8 : f32 to vector<1x128x128xf32>
    %27 = arith.addf %21, %26 : vector<1x128x128xf32>
    %28 = math.rsqrt %27 : vector<1x128x128xf32>
    %c0_9 = arith.constant 0 : index
    %c0_10 = arith.constant 0 : index
    %c0_11 = arith.constant 0 : index
    %29 = vector.load %arg5[%c0_9, %c0_10, %c0_11] : memref<1x128x128xf32, #tpu.memory_space<vmem>>, vector<1x128x128xf32>
    tpu.vector_store %arg5[%c0_9, %c0_10, %c0_11], %28 {strides = array<i32>} : memref<1x128x128xf32, #tpu.memory_space<vmem>>, vector<1x128x128xf32>,
    return
  }
  func.func @transform_0(%arg0: i32, %arg1: i32, %arg2: i32) -> (i32, i32, i32) {
    %c0_i32 = arith.constant 0 : i32
    %c0_i32_0 = arith.constant 0 : i32
    return %arg0, %arg1, %c0_i32 : i32, i32, i32
  }
  func.func @transform_1(%arg0: i32, %arg1: i32, %arg2: i32) -> (i32, i32, i32) {
    %c0_i32 = arith.constant 0 : i32
    %c0_i32_0 = arith.constant 0 : i32
    return %arg0, %c0_i32, %arg2 : i32, i32, i32
  }
  func.func @transform_2(%arg0: i32, %arg1: i32, %arg2: i32) -> (i32, i32, i32) {
    %c0_i32 = arith.constant 0 : i32
    return %arg0, %arg1, %arg2 : i32, i32, i32
  }
  func.func @transform_3(%arg0: i32, %arg1: i32, %arg2: i32) -> (i32, i32, i32) {
    %c0_i32 = arith.constant 0 : i32
    return %arg0, %arg1, %arg2 : i32, i32, i32
  }
}

</mosaic_0001>

<llo_original>
// kernel: tpu_custom_call.1
$region0: #{tpu_custom_call.1}
  #allocation0 [shape = 'u32[]', space=smem, size = 0x4, offset = 0x4, fixed_abs, tag = 'smem constant byte address 0x4 - core index']
  #allocation1 [shape = 'u32[144,128]{1,0:T(1,128)}', space=vmem, size = 0x12000, scoped, tag = 'internal scratch']
  %s0 = inlined_call_operand.vmem [shape: f32[2,128,3], index: 0, kind: input, shape index: {}]
  %s1 = inlined_call_operand.vmem [shape: f32[2,3,128], index: 1, kind: input, shape index: {}]
  %s2 = inlined_call_operand.hbm [shape: f32[2,128,128], index: 2, kind: output, shape index: {0}]
  %s3 = inlined_call_operand.hbm [shape: s8[2,128,128], index: 3, kind: output, shape index: {1}]
  %4 = xla_tuple %s2, %s3
  %s5 = sld [smem:[#allocation0]]
  $region49: #{tpu_custom_call.1} parent=0
    _
  %s7 = ssub.s32 1, %s5
  %s8 = scalar_select 0, %s7, %s5
  $region1: #{tpu_custom_call.1} parent=0
    #allocation2 [shape = 'u8[131072]{0}', space=vmem, size = 0x20000, scoped, tag = 'output window, operand 0']
    #allocation3 [shape = 's32[2]{0}', space=sflag, size = 0x8, scoped, tag = 'scoped memory for tpu_custom_call.1']
    #allocation4 [shape = 'u8[32768]{0}', space=vmem, size = 0x8000, scoped, tag = 'output window, operand 1']
    #allocation5 [shape = 's32[2]{0}', space=sflag, size = 0x8, scoped, tag = 'scoped memory for tpu_custom_call.1']
    %9 = vsyncpa [#allocation3], 0
    %s10 = scalar_lea.sflag [#allocation3], 1
    %11 = vsyncpa %s10, 0
    %12 = vsyncpa [#allocation5], 0
    %s13 = scalar_lea.sflag [#allocation5], 1
    %14 = vsyncpa %s13, 0
    loop: start=0, step=1, limit=4
    $region2: #{tpu_custom_call.1} parent=1 // loop_pre_header
      _
    $region3: #{tpu_custom_call.1} parent=1 // loop_header
      %s16 = sphi 0, %s20
      %p17 = scmp.ge.s32.totalorder %s16, 4
      %s23 = sphi 0, %s42
      %s24 = sphi 0, %s38
      %s25 = sphi 0, %s34
      %s26 = sphi 0, %s23
      %s27 = sphi 0, %s24
      %s28 = sphi 0, %s25
      %s29 = sphi 0, %s26
      %s30 = sphi 0, %s27
      %s31 = sphi 0, %s28
      %s47 = sphi 0, %s49
      %s50 = sphi 0, %s47
      %s51 = sphi 0, %s50
      %s67 = sphi 0, %s51
      %s75 = sphi 0, %s77
      %s78 = sphi 0, %s75
      %s79 = sphi 0, %s78
      %s95 = sphi 0, %s79
      %s105 = sphi 0, %s107
      %s108 = sphi 0, %s105
      %s109 = sphi 0, %s108
      %s125 = sphi 0, %s109
      %s135 = sphi 0, %s137
      %s138 = sphi 0, %s135
      %s139 = sphi 0, %s138
      %s155 = sphi 0, %s139
    $region4: #{tpu_custom_call.1} parent=1 // loop_header_branch
      %19 = sbr.rel (%p17) target = $region8
    $region5: #{tpu_custom_call.1} parent=1 // loop_body
      %s21 = ssub.s32 %s16, 1
      %s22 = ssub.s32 %s16, 2
      %s32 = sadd.s32 1, %s25
      %p33 = scmp.ge.s32.totalorder %s32, 1
      %s34 = scalar_select %p33, 0, %s32
      %s35 = sadd.s32 1, %s24
      %s36 = scalar_select %p33, %s35, %s24
      %p37 = scmp.ge.s32.totalorder %s36, 1
      %s38 = scalar_select %p37, 0, %s36
      %s39 = sadd.s32 1, %s23
      %s40 = scalar_select %p37, %s39, %s23
      %p41 = scmp.ge.s32.totalorder %s40, 2
      %s42 = scalar_select %p41, 0, %s40
      %s43 = ssub.s32 %s23, %s42
      %s44 = ssub.s32 %s24, %s38
      %s45 = sor.u32 %s43, %s44
      %p46 = scmp.eq.s32.totalorder %s45, 0
      %s48 = sadd.s32 %s47, 1
      %s49 = scalar_select %p46, %s47, %s48
      %p52 = pneg %p46
      %p53 = scmp.eq.s32.totalorder %s16, 1
      %p54 = por %p52, %p53
      %p55 = scmp.ne.s32.totalorder %s47, %s50
      %p56 = scmp.eq.s32.totalorder %s16, 0
      %p57 = por %p55, %p56
      %p58 = scmp.ne.s32.totalorder %s47, %s50
      %p59 = scmp.eq.s32.totalorder %s21, 1
      %p60 = por %p58, %p59
      %p61 = scmp.ne.s32.totalorder %s50, %s51
      %p62 = scmp.eq.s32.totalorder %s21, 0
      %p63 = por %p61, %p62
      %p64 = scmp.ne.s32.totalorder %s50, %s51
      %p65 = scmp.eq.s32.totalorder %s22, 1
      %p66 = por %p64, %p65
      %p68 = scmp.ne.s32.totalorder %s51, %s67
      %p69 = scmp.eq.s32.totalorder %s22, 0
      %p70 = por %p68, %p69
      %s71 = ssub.s32 %s23, %s42
      %s72 = ssub.s32 %s25, %s34
      %s73 = sor.u32 %s71, %s72
      %p74 = scmp.eq.s32.totalorder %s73, 0
      %s76 = sadd.s32 %s75, 1
      %s77 = scalar_select %p74, %s75, %s76
      %p80 = pneg %p74
      %p81 = scmp.eq.s32.totalorder %s16, 1
      %p82 = por %p80, %p81
      %p83 = scmp.ne.s32.totalorder %s75, %s78
      %p84 = scmp.eq.s32.totalorder %s16, 0
      %p85 = por %p83, %p84
      %p86 = scmp.ne.s32.totalorder %s75, %s78
      %p87 = scmp.eq.s32.totalorder %s21, 1
      %p88 = por %p86, %p87
      %p89 = scmp.ne.s32.totalorder %s78, %s79
      %p90 = scmp.eq.s32.totalorder %s21, 0
      %p91 = por %p89, %p90
      %p92 = scmp.ne.s32.totalorder %s78, %s79
      %p93 = scmp.eq.s32.totalorder %s22, 1
      %p94 = por %p92, %p93
      %p96 = scmp.ne.s32.totalorder %s79, %s95
      %p97 = scmp.eq.s32.totalorder %s22, 0
      %p98 = por %p96, %p97
      %s99 = ssub.s32 %s23, %s42
      %s100 = ssub.s32 %s24, %s38
      %s101 = sor.u32 %s99, %s100
      %s102 = ssub.s32 %s25, %s34
      %s103 = sor.u32 %s101, %s102
      %p104 = scmp.eq.s32.totalorder %s103, 0
      %s106 = sadd.s32 %s105, 1
      %s107 = scalar_select %p104, %s105, %s106
      %p110 = pneg %p104
      %p111 = scmp.eq.s32.totalorder %s16, 1
      %p112 = por %p110, %p111
      %p113 = scmp.ne.s32.totalorder %s105, %s108
      %p114 = scmp.eq.s32.totalorder %s16, 0
      %p115 = por %p113, %p114
      %p116 = scmp.ne.s32.totalorder %s105, %s108
      %p117 = scmp.eq.s32.totalorder %s21, 1
      %p118 = por %p116, %p117
      %p119 = scmp.ne.s32.totalorder %s108, %s109
      %p120 = scmp.eq.s32.totalorder %s21, 0
      %p121 = por %p119, %p120
      %p122 = scmp.ne.s32.totalorder %s108, %s109
      %p123 = scmp.eq.s32.totalorder %s22, 1
      %p124 = por %p122, %p123
      %p126 = scmp.ne.s32.totalorder %s109, %s125
      %p127 = scmp.eq.s32.totalorder %s22, 0
      %p128 = por %p126, %p127
      %s129 = ssub.s32 %s23, %s42
      %s130 = ssub.s32 %s24, %s38
      %s131 = sor.u32 %s129, %s130
      %s132 = ssub.s32 %s25, %s34
      %s133 = sor.u32 %s131, %s132
      %p134 = scmp.eq.s32.totalorder %s133, 0
      %s136 = sadd.s32 %s135, 1
      %s137 = scalar_select %p134, %s135, %s136
      %p140 = pneg %p134
      %p141 = scmp.eq.s32.totalorder %s16, 1
      %p142 = por %p140, %p141
      %p143 = scmp.ne.s32.totalorder %s135, %s138
      %p144 = scmp.eq.s32.totalorder %s16, 0
      %p145 = por %p143, %p144
      %p146 = scmp.ne.s32.totalorder %s135, %s138
      %p147 = scmp.eq.s32.totalorder %s21, 1
      %p148 = por %p146, %p147
      %p149 = scmp.ne.s32.totalorder %s138, %s139
      %p150 = scmp.eq.s32.totalorder %s21, 0
      %p151 = por %p149, %p150
      %p152 = scmp.ne.s32.totalorder %s138, %s139
      %p153 = scmp.eq.s32.totalorder %s22, 1
      %p154 = por %p152, %p153
      %p156 = scmp.ne.s32.totalorder %s139, %s155
      %p157 = scmp.eq.s32.totalorder %s22, 0
      %p158 = por %p156, %p157
      %p159 = scmp.le.s32.totalorder 1, %s16
      %p160 = scmp.lt.s32.totalorder %s16, 3
      %p161 = pnand %p159, %p160
      %p162 = pneg %p161
      // Predicated region
      $region9: #{tpu_custom_call.1} parent=5 // pred_check
        _
      $region10: #{tpu_custom_call.1} parent=5 // pred_check_branch
        %164 = sbr.rel (%p161) target = $region12
      $region11: #{tpu_custom_call.1} parent=5 // pred_region
        %s165 = ssub.s32 %s16, 1
      $region12: #{tpu_custom_call.1} parent=5 // pred_fallthru
        _
      %p166 = scmp.lt.s32.totalorder %s16, 2
      // Predicated region
      $region13: #{tpu_custom_call.1} parent=5 // pred_check
        %p167 = pneg %p166
      $region14: #{tpu_custom_call.1} parent=5 // pred_check_branch
        %169 = sbr.rel (%p167) target = $region16
      $region15: #{tpu_custom_call.1} parent=5 // pred_region
        // Predicated region
        $region17: #{tpu_custom_call.1} parent=15 // pred_check
          %p170 = pneg %p57
        $region18: #{tpu_custom_call.1} parent=15 // pred_check_branch
          %172 = sbr.rel (%p170) target = $region20
        $region19: #{tpu_custom_call.1} parent=15 // pred_region
          %s173 = smul.u32 16, %s24
          %p174 = scmp.lt.s32.totalorder %s23, 1
          %s175 = scalar_select %p174, %s23, 1
          %p176 = scmp.lt.s32.totalorder %s173, 15
          %s177 = scalar_select %p176, %s173, 15
          %s178 = smul.addr %s175, 16
          %s179 = sadd.s32 %s177, %s178
          %s180 = smul.addr %s179, 8
          %s181 = scalar_lea.vmem %s0, %s180
          %s182 = smul.u32 16, %s24
        $region20: #{tpu_custom_call.1} parent=15 // pred_fallthru
          _
        // Predicated region
        $region21: #{tpu_custom_call.1} parent=15 // pred_check
          %p183 = pneg %p85
        $region22: #{tpu_custom_call.1} parent=15 // pred_check_branch
          %185 = sbr.rel (%p183) target = $region24
        $region23: #{tpu_custom_call.1} parent=15 // pred_region
          %p186 = scmp.lt.s32.totalorder %s23, 1
          %s187 = scalar_select %p186, %s23, 1
          %p188 = scmp.lt.s32.totalorder %s25, 0
          %s189 = scalar_select %p188, %s25, 0
          %s190 = sadd.s32 %s189, %s187
          %s191 = smul.addr %s190, 4
          %s192 = scalar_lea.vmem %s1, %s191
        $region24: #{tpu_custom_call.1} parent=15 // pred_fallthru
          _
      $region16: #{tpu_custom_call.1} parent=5 // pred_fallthru
        _
      %p193 = scmp.le.s32.totalorder 1, %s16
      %p194 = scmp.lt.s32.totalorder %s16, 3
      %p195 = pnand %p193, %p194
      %p196 = pneg %p195
      // Predicated region
      $region25: #{tpu_custom_call.1} parent=5 // pred_check
        _
      $region26: #{tpu_custom_call.1} parent=5 // pred_check_branch
        %198 = sbr.rel (%p195) target = $region28
      $region27: #{tpu_custom_call.1} parent=5 // pred_region
        %s199 = ssub.s32 %s16, 1
        %s200 = smul.u32 16, %s27
        %p201 = scmp.lt.s32.totalorder %s26, 1
        %s202 = scalar_select %p201, %s26, 1
        %p203 = scmp.lt.s32.totalorder %s200, 15
        %s204 = scalar_select %p203, %s200, 15
        %s205 = smul.addr %s202, 16
        %s206 = sadd.s32 %s204, %s205
        %s207 = smul.addr %s206, 8
        %s208 = scalar_lea.vmem %s0, %s207
        %p209 = pneg %p63
        %p210 = pneg %p60
        %p211 = scmp.lt.s32.totalorder %s26, 1
        %s212 = scalar_select %p211, %s26, 1
        %p213 = scmp.lt.s32.totalorder %s28, 0
        %s214 = scalar_select %p213, %s28, 0
        %s215 = sadd.s32 %s214, %s212
        %s216 = smul.addr %s215, 4
        %s217 = scalar_lea.vmem %s1, %s216
        %p218 = pneg %p91
        %p219 = pneg %p88
        %p220 = pneg %p121
        %p221 = pneg %p118
        %s222 = sand.u32 %s108, 1
        %s223 = scalar_lea.sflag [#allocation3], %s222
        %s224 = sand.u32 %s108, 1
        %s225 = smul.addr %s224, 128
        %s226 = scalar_lea.vmem [#allocation2], %s225
        %p227 = pneg %p151
        %p228 = pneg %p148
        %s229 = sand.u32 %s138, 1
        %s230 = scalar_lea.sflag [#allocation5], %s229
        %s231 = sand.u32 %s138, 1
        %s232 = smul.addr %s231, 32
        %s233 = scalar_lea.vmem [#allocation4], %s232
        %s234 = smul.u32 16, %s27
        %p235 = scmp.lt.s32.totalorder %s26, 1
        %s236 = scalar_select %p235, %s26, 1
        %p237 = scmp.lt.s32.totalorder %s234, 15
        %s238 = scalar_select %p237, %s234, 15
        %s239 = smul.addr %s236, 16
        %s240 = sadd.s32 %s238, %s239
        %s241 = smul.addr %s240, 8
        %s242 = scalar_lea.vmem %s0, %s241
        %s243 = smul.u32 16, %s27
        %p244 = scmp.lt.s32.totalorder %s26, 1
        %s245 = scalar_select %p244, %s26, 1
        %p246 = scmp.lt.s32.totalorder %s28, 0
        %s247 = scalar_select %p246, %s28, 0
        %s248 = sadd.s32 %s247, %s245
        %s249 = smul.addr %s248, 4
        %s250 = scalar_lea.vmem %s1, %s249
        %s251 = smul.u32 16, %s27
        %s252 = smul.u32 4, %s27
        %v255 = vld [vmem:[%s242] sm:$0xff]
        %v256 = vld [vmem:[%s242 + $0x8] sm:$0xff]
        %v257 = vld [vmem:[%s242 + $0x10] sm:$0xff]
        %v258 = vld [vmem:[%s242 + $0x18] sm:$0xff]
        %v259 = vld [vmem:[%s242 + $0x20] sm:$0xff]
        %v260 = vld [vmem:[%s242 + $0x28] sm:$0xff]
        %v261 = vld [vmem:[%s242 + $0x30] sm:$0xff]
        %v262 = vld [vmem:[%s242 + $0x38] sm:$0xff]
        %v263 = vld [vmem:[%s242 + $0x40] sm:$0xff]
        %v264 = vld [vmem:[%s242 + $0x48] sm:$0xff]
        %v265 = vld [vmem:[%s242 + $0x50] sm:$0xff]
        %v266 = vld [vmem:[%s242 + $0x58] sm:$0xff]
        %v267 = vld [vmem:[%s242 + $0x60] sm:$0xff]
        %v268 = vld [vmem:[%s242 + $0x68] sm:$0xff]
        %v269 = vld [vmem:[%s242 + $0x70] sm:$0xff]
        %v270 = vld [vmem:[%s242 + $0x78] sm:$0xff]
        %v271 = vld [vmem:[%s250] sm:$0x7]
        %273 = vset.pattern.permute.xlu0 0
        %274 = vperm.xlu0 %273, %v255
        %v275 = vpop.permute.xlu0 %274
        %278 = vset.pattern.permute.xlu0 0
        %279 = vperm.xlu0 %278, %v256
        %v280 = vpop.permute.xlu0 %279
        %283 = vset.pattern.permute.xlu0 0
        %284 = vperm.xlu0 %283, %v257
        %v285 = vpop.permute.xlu0 %284
        %288 = vset.pattern.permute.xlu0 0
        %289 = vperm.xlu0 %288, %v258
        %v290 = vpop.permute.xlu0 %289
        %293 = vset.pattern.permute.xlu0 0
        %294 = vperm.xlu0 %293, %v259
        %v295 = vpop.permute.xlu0 %294
        %298 = vset.pattern.permute.xlu0 0
        %299 = vperm.xlu0 %298, %v260
        %v300 = vpop.permute.xlu0 %299
        %303 = vset.pattern.permute.xlu0 0
        %304 = vperm.xlu0 %303, %v261
        %v305 = vpop.permute.xlu0 %304
        %308 = vset.pattern.permute.xlu0 0
        %309 = vperm.xlu0 %308, %v262
        %v310 = vpop.permute.xlu0 %309
        %313 = vset.pattern.permute.xlu0 0
        %314 = vperm.xlu0 %313, %v263
        %v315 = vpop.permute.xlu0 %314
        %318 = vset.pattern.permute.xlu0 0
        %319 = vperm.xlu0 %318, %v264
        %v320 = vpop.permute.xlu0 %319
        %323 = vset.pattern.permute.xlu0 0
        %324 = vperm.xlu0 %323, %v265
        %v325 = vpop.permute.xlu0 %324
        %328 = vset.pattern.permute.xlu0 0
        %329 = vperm.xlu0 %328, %v266
        %v330 = vpop.permute.xlu0 %329
        %333 = vset.pattern.permute.xlu0 0
        %334 = vperm.xlu0 %333, %v267
        %v335 = vpop.permute.xlu0 %334
        %338 = vset.pattern.permute.xlu0 0
        %339 = vperm.xlu0 %338, %v268
        %v340 = vpop.permute.xlu0 %339
        %343 = vset.pattern.permute.xlu0 0
        %344 = vperm.xlu0 %343, %v269
        %v345 = vpop.permute.xlu0 %344
        %348 = vset.pattern.permute.xlu0 0
        %349 = vperm.xlu0 %348, %v270
        %v350 = vpop.permute.xlu0 %349
        %v352 = vlaneseq
        %v353 = vshrl.u32 %v352, 7
        %v354 = vsub.s32 0, %v353
        %v355 = vrot.slane %v271, %v354
        %v356 = vsub.f32 %v275, %v355
        %v357 = vsub.f32 %v280, %v355
        %v358 = vsub.f32 %v285, %v355
        %v359 = vsub.f32 %v290, %v355
        %v360 = vsub.f32 %v295, %v355
        %v361 = vsub.f32 %v300, %v355
        %v362 = vsub.f32 %v305, %v355
        %v363 = vsub.f32 %v310, %v355
        %v364 = vsub.f32 %v315, %v355
        %v365 = vsub.f32 %v320, %v355
        %v366 = vsub.f32 %v325, %v355
        %v367 = vsub.f32 %v330, %v355
        %v368 = vsub.f32 %v335, %v355
        %v369 = vsub.f32 %v340, %v355
        %v370 = vsub.f32 %v345, %v355
        %v371 = vsub.f32 %v350, %v355
        %v372 = vmul.f32 %v356, %v356
        %v373 = vmul.f32 %v357, %v357
        %v374 = vmul.f32 %v358, %v358
        %v375 = vmul.f32 %v359, %v359
        %v376 = vmul.f32 %v360, %v360
        %v377 = vmul.f32 %v361, %v361
        %v378 = vmul.f32 %v362, %v362
        %v379 = vmul.f32 %v363, %v363
        %v380 = vmul.f32 %v364, %v364
        %v381 = vmul.f32 %v365, %v365
        %v382 = vmul.f32 %v366, %v366
        %v383 = vmul.f32 %v367, %v367
        %v384 = vmul.f32 %v368, %v368
        %v385 = vmul.f32 %v369, %v369
        %v386 = vmul.f32 %v370, %v370
        %v387 = vmul.f32 %v371, %v371
        %388 = vset.pattern.permute.xlu0 1
        %389 = vperm.xlu0 %388, %v255
        %v390 = vpop.permute.xlu0 %389
        %392 = vset.pattern.permute.xlu0 1
        %393 = vperm.xlu0 %392, %v256
        %v394 = vpop.permute.xlu0 %393
        %396 = vset.pattern.permute.xlu0 1
        %397 = vperm.xlu0 %396, %v257
        %v398 = vpop.permute.xlu0 %397
        %400 = vset.pattern.permute.xlu0 1
        %401 = vperm.xlu0 %400, %v258
        %v402 = vpop.permute.xlu0 %401
        %404 = vset.pattern.permute.xlu0 1
        %405 = vperm.xlu0 %404, %v259
        %v406 = vpop.permute.xlu0 %405
        %408 = vset.pattern.permute.xlu0 1
        %409 = vperm.xlu0 %408, %v260
        %v410 = vpop.permute.xlu0 %409
        %412 = vset.pattern.permute.xlu0 1
        %413 = vperm.xlu0 %412, %v261
        %v414 = vpop.permute.xlu0 %413
        %416 = vset.pattern.permute.xlu0 1
        %417 = vperm.xlu0 %416, %v262
        %v418 = vpop.permute.xlu0 %417
        %420 = vset.pattern.permute.xlu0 1
        %421 = vperm.xlu0 %420, %v263
        %v422 = vpop.permute.xlu0 %421
        %424 = vset.pattern.permute.xlu0 1
        %425 = vperm.xlu0 %424, %v264
        %v426 = vpop.permute.xlu0 %425
        %428 = vset.pattern.permute.xlu0 1
        %429 = vperm.xlu0 %428, %v265
        %v430 = vpop.permute.xlu0 %429
        %432 = vset.pattern.permute.xlu0 1
        %433 = vperm.xlu0 %432, %v266
        %v434 = vpop.permute.xlu0 %433
        %436 = vset.pattern.permute.xlu0 1
        %437 = vperm.xlu0 %436, %v267
        %v438 = vpop.permute.xlu0 %437
        %440 = vset.pattern.permute.xlu0 1
        %441 = vperm.xlu0 %440, %v268
        %v442 = vpop.permute.xlu0 %441
        %444 = vset.pattern.permute.xlu0 1
        %445 = vperm.xlu0 %444, %v269
        %v446 = vpop.permute.xlu0 %445
        %448 = vset.pattern.permute.xlu0 1
        %449 = vperm.xlu0 %448, %v270
        %v450 = vpop.permute.xlu0 %449
        %v452 = vlaneseq
        %v453 = vshrl.u32 %v452, 7
        %v454 = vsub.s32 1, %v453
        %v455 = vrot.slane %v271, %v454
        %v456 = vsub.f32 %v390, %v455
        %v457 = vsub.f32 %v394, %v455
        %v458 = vsub.f32 %v398, %v455
        %v459 = vsub.f32 %v402, %v455
        %v460 = vsub.f32 %v406, %v455
        %v461 = vsub.f32 %v410, %v455
        %v462 = vsub.f32 %v414, %v455
        %v463 = vsub.f32 %v418, %v455
        %v464 = vsub.f32 %v422, %v455
        %v465 = vsub.f32 %v426, %v455
        %v466 = vsub.f32 %v430, %v455
        %v467 = vsub.f32 %v434, %v455
        %v468 = vsub.f32 %v438, %v455
        %v469 = vsub.f32 %v442, %v455
        %v470 = vsub.f32 %v446, %v455
        %v471 = vsub.f32 %v450, %v455
        %v472 = vmul.f32 %v456, %v456
        %v473 = vmul.f32 %v457, %v457
        %v474 = vmul.f32 %v458, %v458
        %v475 = vmul.f32 %v459, %v459
        %v476 = vmul.f32 %v460, %v460
        %v477 = vmul.f32 %v461, %v461
        %v478 = vmul.f32 %v462, %v462
        %v479 = vmul.f32 %v463, %v463
        %v480 = vmul.f32 %v464, %v464
        %v481 = vmul.f32 %v465, %v465
        %v482 = vmul.f32 %v466, %v466
        %v483 = vmul.f32 %v467, %v467
        %v484 = vmul.f32 %v468, %v468
        %v485 = vmul.f32 %v469, %v469
        %v486 = vmul.f32 %v470, %v470
        %v487 = vmul.f32 %v471, %v471
        %v488 = vadd.f32 %v372, %v472
        %v489 = vadd.f32 %v373, %v473
        %v490 = vadd.f32 %v374, %v474
        %v491 = vadd.f32 %v375, %v475
        %v492 = vadd.f32 %v376, %v476
        %v493 = vadd.f32 %v377, %v477
        %v494 = vadd.f32 %v378, %v478
        %v495 = vadd.f32 %v379, %v479
        %v496 = vadd.f32 %v380, %v480
        %v497 = vadd.f32 %v381, %v481
        %v498 = vadd.f32 %v382, %v482
        %v499 = vadd.f32 %v383, %v483
        %v500 = vadd.f32 %v384, %v484
        %v501 = vadd.f32 %v385, %v485
        %v502 = vadd.f32 %v386, %v486
        %v503 = vadd.f32 %v387, %v487
        %504 = vset.pattern.permute.xlu0 2
        %505 = vperm.xlu0 %504, %v255
        %v506 = vpop.permute.xlu0 %505
        %508 = vset.pattern.permute.xlu0 2
        %509 = vperm.xlu0 %508, %v256
        %v510 = vpop.permute.xlu0 %509
        %512 = vset.pattern.permute.xlu0 2
        %513 = vperm.xlu0 %512, %v257
        %v514 = vpop.permute.xlu0 %513
        %516 = vset.pattern.permute.xlu0 2
        %517 = vperm.xlu0 %516, %v258
        %v518 = vpop.permute.xlu0 %517
        %520 = vset.pattern.permute.xlu0 2
        %521 = vperm.xlu0 %520, %v259
        %v522 = vpop.permute.xlu0 %521
        %524 = vset.pattern.permute.xlu0 2
        %525 = vperm.xlu0 %524, %v260
        %v526 = vpop.permute.xlu0 %525
        %528 = vset.pattern.permute.xlu0 2
        %529 = vperm.xlu0 %528, %v261
        %v530 = vpop.permute.xlu0 %529
        %532 = vset.pattern.permute.xlu0 2
        %533 = vperm.xlu0 %532, %v262
        %v534 = vpop.permute.xlu0 %533
        %536 = vset.pattern.permute.xlu0 2
        %537 = vperm.xlu0 %536, %v263
        %v538 = vpop.permute.xlu0 %537
        %540 = vset.pattern.permute.xlu0 2
        %541 = vperm.xlu0 %540, %v264
        %v542 = vpop.permute.xlu0 %541
        %544 = vset.pattern.permute.xlu0 2
        %545 = vperm.xlu0 %544, %v265
        %v546 = vpop.permute.xlu0 %545
        %548 = vset.pattern.permute.xlu0 2
        %549 = vperm.xlu0 %548, %v266
        %v550 = vpop.permute.xlu0 %549
        %552 = vset.pattern.permute.xlu0 2
        %553 = vperm.xlu0 %552, %v267
        %v554 = vpop.permute.xlu0 %553
        %556 = vset.pattern.permute.xlu0 2
        %557 = vperm.xlu0 %556, %v268
        %v558 = vpop.permute.xlu0 %557
        %560 = vset.pattern.permute.xlu0 2
        %561 = vperm.xlu0 %560, %v269
        %v562 = vpop.permute.xlu0 %561
        %564 = vset.pattern.permute.xlu0 2
        %565 = vperm.xlu0 %564, %v270
        %v566 = vpop.permute.xlu0 %565
        %v568 = vlaneseq
        %v569 = vshrl.u32 %v568, 7
        %v570 = vsub.s32 2, %v569
        %v571 = vrot.slane %v271, %v570
        %v572 = vsub.f32 %v506, %v571
        %v573 = vsub.f32 %v510, %v571
        %v574 = vsub.f32 %v514, %v571
        %v575 = vsub.f32 %v518, %v571
        %v576 = vsub.f32 %v522, %v571
        %v577 = vsub.f32 %v526, %v571
        %v578 = vsub.f32 %v530, %v571
        %v579 = vsub.f32 %v534, %v571
        %v580 = vsub.f32 %v538, %v571
        %v581 = vsub.f32 %v542, %v571
        %v582 = vsub.f32 %v546, %v571
        %v583 = vsub.f32 %v550, %v571
        %v584 = vsub.f32 %v554, %v571
        %v585 = vsub.f32 %v558, %v571
        %v586 = vsub.f32 %v562, %v571
        %v587 = vsub.f32 %v566, %v571
        %v588 = vmul.f32 %v572, %v572
        %v589 = vmul.f32 %v573, %v573
        %v590 = vmul.f32 %v574, %v574
        %v591 = vmul.f32 %v575, %v575
        %v592 = vmul.f32 %v576, %v576
        %v593 = vmul.f32 %v577, %v577
        %v594 = vmul.f32 %v578, %v578
        %v595 = vmul.f32 %v579, %v579
        %v596 = vmul.f32 %v580, %v580
        %v597 = vmul.f32 %v581, %v581
        %v598 = vmul.f32 %v582, %v582
        %v599 = vmul.f32 %v583, %v583
        %v600 = vmul.f32 %v584, %v584
        %v601 = vmul.f32 %v585, %v585
        %v602 = vmul.f32 %v586, %v586
        %v603 = vmul.f32 %v587, %v587
        %v604 = vadd.f32 %v488, %v588
        %v605 = vadd.f32 %v489, %v589
        %v606 = vadd.f32 %v490, %v590
        %v607 = vadd.f32 %v491, %v591
        %v608 = vadd.f32 %v492, %v592
        %v609 = vadd.f32 %v493, %v593
        %v610 = vadd.f32 %v494, %v594
        %v611 = vadd.f32 %v495, %v595
        %v612 = vadd.f32 %v496, %v596
        %v613 = vadd.f32 %v497, %v597
        %v614 = vadd.f32 %v498, %v598
        %v615 = vadd.f32 %v499, %v599
        %v616 = vadd.f32 %v500, %v600
        %v617 = vadd.f32 %v501, %v601
        %v618 = vadd.f32 %v502, %v602
        %v619 = vadd.f32 %v503, %v603
        %vm620 = vcmp.le.f32.partialorder %v604, 1e-06
        %vm621 = vcmp.le.f32.partialorder %v605, 1e-06
        %vm622 = vcmp.le.f32.partialorder %v606, 1e-06
        %vm623 = vcmp.le.f32.partialorder %v607, 1e-06
        %vm624 = vcmp.le.f32.partialorder %v608, 1e-06
        %vm625 = vcmp.le.f32.partialorder %v609, 1e-06
        %vm626 = vcmp.le.f32.partialorder %v610, 1e-06
        %vm627 = vcmp.le.f32.partialorder %v611, 1e-06
        %vm628 = vcmp.le.f32.partialorder %v612, 1e-06
        %vm629 = vcmp.le.f32.partialorder %v613, 1e-06
        %vm630 = vcmp.le.f32.partialorder %v614, 1e-06
        %vm631 = vcmp.le.f32.partialorder %v615, 1e-06
        %vm632 = vcmp.le.f32.partialorder %v616, 1e-06
        %vm633 = vcmp.le.f32.partialorder %v617, 1e-06
        %vm634 = vcmp.le.f32.partialorder %v618, 1e-06
        %vm635 = vcmp.le.f32.partialorder %v619, 1e-06
        %vm636 = vmpackc.low %vm621, %vm620
        %vm637 = vmpackc.low %vm623, %vm622
        %vm638 = vmpackc.even %vm637, %vm636
        %vm639 = vmpackc.low %vm625, %vm624
        %vm640 = vmpackc.low %vm627, %vm626
        %vm641 = vmpackc.even %vm640, %vm639
        %vm642 = vmpackc.low %vm629, %vm628
        %vm643 = vmpackc.low %vm631, %vm630
        %vm644 = vmpackc.even %vm643, %vm642
        %vm645 = vmpackc.low %vm633, %vm632
        %vm646 = vmpackc.low %vm635, %vm634
        %vm647 = vmpackc.even %vm646, %vm645
        %v648 = vsel %vm638, 16843009, 0
        %v649 = vsel %vm641, 16843009, 0
        %v650 = vsel %vm644, 16843009, 0
        %v651 = vsel %vm647, 16843009, 0
        %652 = vst [vmem:[%s233] sm:$0xff] %v648
        %653 = vst [vmem:[%s233 + $0x8] sm:$0xff] %v649
        %654 = vst [vmem:[%s233 + $0x10] sm:$0xff] %v650
        %655 = vst [vmem:[%s233 + $0x18] sm:$0xff] %v651
        %v656 = vadd.f32 %v604, 1e-32
        %v657 = vadd.f32 %v605, 1e-32
        %v658 = vadd.f32 %v606, 1e-32
        %v659 = vadd.f32 %v607, 1e-32
        %v660 = vadd.f32 %v608, 1e-32
        %v661 = vadd.f32 %v609, 1e-32
        %v662 = vadd.f32 %v610, 1e-32
        %v663 = vadd.f32 %v611, 1e-32
        %v664 = vadd.f32 %v612, 1e-32
        %v665 = vadd.f32 %v613, 1e-32
        %v666 = vadd.f32 %v614, 1e-32
        %v667 = vadd.f32 %v615, 1e-32
        %v668 = vadd.f32 %v616, 1e-32
        %v669 = vadd.f32 %v617, 1e-32
        %v670 = vadd.f32 %v618, 1e-32
        %v671 = vadd.f32 %v619, 1e-32
        %v672 = vrsqrt.pop %v656
        %v673 = vrsqrt.pop %v657
        %v674 = vrsqrt.pop %v658
        %v675 = vrsqrt.pop %v659
        %v676 = vrsqrt.pop %v660
        %v677 = vrsqrt.pop %v661
        %v678 = vrsqrt.pop %v662
        %v679 = vrsqrt.pop %v663
        %v680 = vrsqrt.pop %v664
        %v681 = vrsqrt.pop %v665
        %v682 = vrsqrt.pop %v666
        %v683 = vrsqrt.pop %v667
        %v684 = vrsqrt.pop %v668
        %v685 = vrsqrt.pop %v669
        %v686 = vrsqrt.pop %v670
        %v687 = vrsqrt.pop %v671
        %688 = vst [vmem:[%s226] sm:$0xff] %v672
        %689 = vst [vmem:[%s226 + $0x8] sm:$0xff] %v673
        %690 = vst [vmem:[%s226 + $0x10] sm:$0xff] %v674
        %691 = vst [vmem:[%s226 + $0x18] sm:$0xff] %v675
        %692 = vst [vmem:[%s226 + $0x20] sm:$0xff] %v676
        %693 = vst [vmem:[%s226 + $0x28] sm:$0xff] %v677
        %694 = vst [vmem:[%s226 + $0x30] sm:$0xff] %v678
        %695 = vst [vmem:[%s226 + $0x38] sm:$0xff] %v679
        %696 = vst [vmem:[%s226 + $0x40] sm:$0xff] %v680
        %697 = vst [vmem:[%s226 + $0x48] sm:$0xff] %v681
        %698 = vst [vmem:[%s226 + $0x50] sm:$0xff] %v682
        %699 = vst [vmem:[%s226 + $0x58] sm:$0xff] %v683
        %700 = vst [vmem:[%s226 + $0x60] sm:$0xff] %v684
        %701 = vst [vmem:[%s226 + $0x68] sm:$0xff] %v685
        %702 = vst [vmem:[%s226 + $0x70] sm:$0xff] %v686
        %703 = vst [vmem:[%s226 + $0x78] sm:$0xff] %v687
        %s704 = sand.u32 %s108, 1
        %s705 = scalar_lea.sflag [#allocation3], %s704
        %s706 = sand.u32 %s108, 1
        %s707 = smul.addr %s706, 128
        %s708 = scalar_lea.vmem [#allocation2], %s707
        %s709 = sand.u32 %s138, 1
        %s710 = scalar_lea.sflag [#allocation5], %s709
        %s711 = sand.u32 %s138, 1
        %s712 = smul.addr %s711, 32
        %s713 = scalar_lea.vmem [#allocation4], %s712
        // Predicated region
        $region29: #{tpu_custom_call.1} parent=27 // pred_check
          %p714 = pneg %p118
        $region30: #{tpu_custom_call.1} parent=27 // pred_check_branch
          %716 = sbr.rel (%p714) target = $region32
        $region31: #{tpu_custom_call.1} parent=27 // pred_region
          %s717 = smul.u32 16, %s27
          %s719 = ssub.s32 2048, 2048
          %720 = vsyncadd %s705, %s719
          %s721 = sadd.s32 %s28, %s717
          %s722 = smul.addr %s26, 16
          %s723 = sadd.s32 %s721, %s722
          %s724 = smul.addr %s723, 128
          %s725 = scalar_lea.hbm %s2, %s724
          %s726 = sshll.u32 %s708, 4
          %s727 = int_to_ptr.vmem [resolvable:$true] %s726
          %732 = dma.vmem_to_hbm [thread:$0]  %s727, 2048, %s725, %s705, 128, 128, 8
        $region32: #{tpu_custom_call.1} parent=27 // pred_fallthru
          _
        // Predicated region
        $region33: #{tpu_custom_call.1} parent=27 // pred_check
          %p733 = pneg %p148
        $region34: #{tpu_custom_call.1} parent=27 // pred_check_branch
          %735 = sbr.rel (%p733) target = $region36
        $region35: #{tpu_custom_call.1} parent=27 // pred_region
          %s736 = smul.u32 4, %s27
          %s738 = ssub.s32 512, 512
          %739 = vsyncadd %s710, %s738
          %s740 = sadd.s32 %s28, %s736
          %s741 = smul.addr %s26, 4
          %s742 = sadd.s32 %s740, %s741
          %s743 = smul.addr %s742, 128
          %s744 = scalar_lea.hbm %s3, %s743
          %s745 = sshll.u32 %s713, 4
          %s746 = int_to_ptr.vmem [resolvable:$true] %s745
          %751 = dma.vmem_to_hbm [thread:$0]  %s746, 512, %s744, %s710, 128, 128, 8
        $region36: #{tpu_custom_call.1} parent=27 // pred_fallthru
          _
      $region28: #{tpu_custom_call.1} parent=5 // pred_fallthru
        _
      %p752 = scmp.le.s32.totalorder 2, %s16
      // Predicated region
      $region37: #{tpu_custom_call.1} parent=5 // pred_check
        %p753 = pneg %p752
      $region38: #{tpu_custom_call.1} parent=5 // pred_check_branch
        %755 = sbr.rel (%p753) target = $region40
      $region39: #{tpu_custom_call.1} parent=5 // pred_region
        %s756 = ssub.s32 %s16, 2
        // Predicated region
        $region41: #{tpu_custom_call.1} parent=39 // pred_check
          %p757 = pneg %p124
        $region42: #{tpu_custom_call.1} parent=39 // pred_check_branch
          %759 = sbr.rel (%p757) target = $region44
        $region43: #{tpu_custom_call.1} parent=39 // pred_region
          %s760 = sand.u32 %s109, 1
          %s761 = scalar_lea.sflag [#allocation3], %s760
          %s762 = sand.u32 %s109, 1
          %s763 = smul.addr %s762, 128
          %s764 = scalar_lea.vmem [#allocation2], %s763
          %765 = dma.done %s761, 2048
        $region44: #{tpu_custom_call.1} parent=39 // pred_fallthru
          _
        // Predicated region
        $region45: #{tpu_custom_call.1} parent=39 // pred_check
          %p766 = pneg %p154
        $region46: #{tpu_custom_call.1} parent=39 // pred_check_branch
          %768 = sbr.rel (%p766) target = $region48
        $region47: #{tpu_custom_call.1} parent=39 // pred_region
          %s769 = sand.u32 %s139, 1
          %s770 = scalar_lea.sflag [#allocation5], %s769
          %s771 = sand.u32 %s139, 1
          %s772 = smul.addr %s771, 32
          %s773 = scalar_lea.vmem [#allocation4], %s772
          %774 = dma.done %s770, 512
        $region48: #{tpu_custom_call.1} parent=39 // pred_fallthru
          _
      $region40: #{tpu_custom_call.1} parent=5 // pred_fallthru
        _
    $region6: #{tpu_custom_call.1} parent=1 // loop_footer
      %s20 = sadd.s32 1, %s16
    $region7: #{tpu_custom_call.1} parent=1 // loop_footer_branch
      %15 = sbr.rel target = $region3
    $region8: #{tpu_custom_call.1} parent=1 // loop_exit
      _
    %775 = vsyncpa [#allocation3], 1
    %s776 = scalar_lea.sflag [#allocation3], 1
    %777 = vsyncpa %s776, 1
    %778 = vsyncpa [#allocation5], 1
    %s779 = scalar_lea.sflag [#allocation5], 1
    %780 = vsyncpa %s779, 1

</llo_original>
